<compile_context>
chip_gen: v7x
topology: tpu7x:2x2x1
jax: 0.10.0
libtpu: 0.0.40
codegen_flags: <defaults>
</compile_context>

<pallas_src>
import jax
import jax.numpy as jnp
from jax.experimental import pallas as pl
from jax.experimental.pallas import tpu as pltpu


def _round_up(x, m):
    return (x + m - 1) // m * m


def _vmem_config():
    """Per-generation VMEM sizing (v5e/v6e: 128 MiB, v7x: 64 MiB per TensorCore)."""
    cap = 64 * 1024 * 1024                       # conservative fallback (= v7x per-TC VMEM)
    try:
        cap = int(pltpu.get_tpu_info().vmem_capacity_bytes)
    except Exception:
        pass
    # Per-buffer hidden-tile budget: 16 MiB where VMEM allows (v5e/v6e/v7x),
    # never more than 1/4 of physical VMEM (2 hidden buffers + everything else).
    tile_budget = max(4 << 20, min(16 << 20, cap // 4))
    # Explicit scoped-VMEM limit: ~85% of physical, capped at 100 MiB.
    vmem_limit = max(32 << 20, int(min(cap * 0.85, 100 << 20)))
    return tile_budget, vmem_limit


# --------------------- kernel 1: streamed masked-sum pooling ---------------------

def _pool_kernel(h_ref, m_ref, sum_ref, cnt_ref):
    """grid = (batch tiles [parallel], sequence tiles [arbitrary/reduction]).

    Output blocks keep the same index across the sequence axis, so they act as
    resident f32 accumulators:
      sum_ref [TB, 1, D]   : sum_s mask[b,s] * hidden[b,s,:]
      cnt_ref [TB, 1, 128] : sum_s mask[b,s]   (lane-broadcast, lane-dense)
    """
    j = pl.program_id(1)

    @pl.when(j == 0)
    def _():
        sum_ref[...] = jnp.zeros_like(sum_ref)
        cnt_ref[...] = jnp.zeros_like(cnt_ref)

    h = h_ref[...]                       # [TB, TS, D]  native dtype (e.g. bf16)
    m = m_ref[...]                       # [TB, 1, TS]  same dtype as h
    # Masked-sum pooling on the (otherwise idle) MXU: bf16 operands on the wire,
    # f32 accumulation.  No f32 upcast of the hidden tile, no mask relayout.
    sum_ref[...] += jnp.einsum("bqs,bsd->bqd", m, h,
                               preferred_element_type=jnp.float32)
    cnt = jnp.sum(m.astype(jnp.float32), axis=2, keepdims=True)     # [TB, 1, 1]
    cnt_ref[...] += jnp.broadcast_to(cnt, cnt_ref.shape)


# --------------------- kernel 2: classifier MLP + weighted CE --------------------

def _mlp_ce_kernel(sum_ref, cnt_ref, w1_ref, b1_ref, w2_ref, b2_ref,
                   w3_ref, b3_ref, lab_ref, wts_ref, logits_ref, losses_ref):
    cnt = cnt_ref[...]
    denom = jnp.maximum(cnt[:, 0:1], 1e-9)             # torch.clamp(min=1e-9)
    pooled = sum_ref[...] / denom                       # [B, D] f32

    cdt = w1_ref.dtype                                  # bf16 weights -> feed MXU bf16
    x = jnp.dot(pooled.astype(cdt), w1_ref[...],
                preferred_element_type=jnp.float32) + b1_ref[...]
    x = jnp.maximum(x, 0.0)
    # TODO(synk): nn.Dropout is identity in eval mode; stochastic dropout not applied.
    x = jnp.dot(x.astype(cdt), w2_ref[...],
                preferred_element_type=jnp.float32) + b2_ref[...]
    x = jnp.maximum(x, 0.0)
    logits = jnp.dot(x.astype(cdt), w3_ref[...],
                     preferred_element_type=jnp.float32) + b3_ref[...]
    logits_ref[...] = logits                            # [B, C_pad] lane-dense

    # Weighted cross-entropy (padded class columns carry a -1e30 bias -> zero prob).
    mx = jnp.max(logits, axis=-1, keepdims=True)
    lse = mx + jnp.log(jnp.sum(jnp.exp(logits - mx), axis=-1, keepdims=True))
    logp = logits - lse
    iota = jax.lax.broadcasted_iota(jnp.int32, logits.shape, 1)
    onehot = (iota == lab_ref[...]).astype(jnp.float32)
    per_sample = -jnp.sum(onehot * logp, axis=-1, keepdims=True)     # [B, 1]
    weighted = per_sample * wts_ref[...][:, 0:1]
    losses_ref[...] = jnp.broadcast_to(weighted, losses_ref.shape)   # lane-dense


# --------------------------------- wrapper ---------------------------------------

def amp_classifier_forward(hidden_states, attention_mask, params,
                           labels=None, weights=None,
                           *, batch_tile=8, max_seq_tile=512):
    """Everything after the ESM encoder: masked mean-pool -> MLP -> weighted CE."""
    B, S, D = hidden_states.shape
    H = params["w1"].shape[1]
    C = params["w3"].shape[1]
    C_pad = _round_up(C, 128)

    if attention_mask is None:      # torch falls back to plain mean over the sequence
        attention_mask = jnp.ones((B, S), jnp.float32)
    has_labels = labels is not None
    if labels is None:
        labels = jnp.zeros((B,), jnp.int32)
    if weights is None:             # CrossEntropyLoss default 'mean' == unit weights
        weights = jnp.ones((B,), jnp.float32)

    tile_budget, vmem_limit = _vmem_config()

    # --- batch tiling: keep >= 2 batch tiles so both v7x TensorCores get work ----
    TB = int(batch_tile)
    if B >= 2 and pl.cdiv(B, TB) < 2:
        TB = pl.cdiv(B, 2)
    TB = max(1, min(TB, B))
    B_pad = _round_up(B, TB)
    nb = B_pad // TB

    # --- sequence tiling: biggest tile that fits the per-buffer VMEM budget ------
    itemsize = jnp.dtype(hidden_states.dtype).itemsize
    max_seq_tile = max(128, (int(max_seq_tile) // 128) * 128)
    ts_cap = max(128, (tile_budget // (TB * D * itemsize)) // 128 * 128)
    s8 = _round_up(S, 8)
    if s8 <= min(max_seq_tile, ts_cap):
        TS = s8                                   # single sequence step (small S)
    else:
        TS = min(max_seq_tile, ts_cap)            # multiple of 128
    S_pad = _round_up(S, TS)
    ns = S_pad // TS

    # --- pad + lay out inputs (padded positions carry mask == 0) -----------------
    h = hidden_states                             # keep native dtype (e.g. bf16) on the wire
    m = attention_mask
    if (B_pad, S_pad) != (B, S):
        h = jnp.pad(h, ((0, B_pad - B), (0, S_pad - S), (0, 0)))
        m = jnp.pad(m, ((0, B_pad - B), (0, S_pad - S)))
    m3 = m.astype(h.dtype).reshape(B_pad, 1, S_pad)   # rank-3 for the batched MXU contraction

    cost = pl.CostEstimate(
        flops=int(2 * B_pad * S_pad * D),
        transcendentals=0,
        bytes_accessed=int(B_pad * S_pad * D * itemsize + B_pad * S_pad * itemsize
                           + 4 * B_pad * (D + 128)))

    sum3d, cnt3d = pl.pallas_call(
        _pool_kernel,
        out_shape=(jax.ShapeDtypeStruct((B_pad, 1, D), jnp.float32),
                   jax.ShapeDtypeStruct((B_pad, 1, 128), jnp.float32)),
        grid_spec=pltpu.PrefetchScalarGridSpec(
            num_scalar_prefetch=0,
            grid=(nb, ns),
            in_specs=[
                pl.BlockSpec((TB, TS, D), lambda i, j: (i, j, 0)),   # hidden (streamed)
                pl.BlockSpec((TB, 1, TS), lambda i, j: (i, 0, j)),   # mask   (streamed)
            ],
            out_specs=(
                pl.BlockSpec((TB, 1, D), lambda i, j: (i, 0, 0)),    # f32 accumulators,
                pl.BlockSpec((TB, 1, 128), lambda i, j: (i, 0, 0)),  # resident over seq
            )),
        compiler_params=pltpu.CompilerParams(
            dimension_semantics=("parallel", "arbitrary"),
            vmem_limit_bytes=vmem_limit),
        cost_estimate=cost,
    )(h, m3)

    pooled_sum = sum3d.reshape(B_pad, D)          # free metadata reshape in XLA
    mask_cnt = cnt3d.reshape(B_pad, 128)

    # --- classifier head inputs: bf16 weight matrices, f32 biases, padded classes
    wdt = jnp.bfloat16
    w1 = params["w1"].astype(wdt)
    b1 = params["b1"].reshape(1, H).astype(jnp.float32)
    w2 = params["w2"].astype(wdt)
    b2 = params["b2"].reshape(1, H).astype(jnp.float32)
    w3 = jnp.zeros((H, C_pad), wdt).at[:, :C].set(params["w3"].astype(wdt))
    b3 = jnp.full((1, C_pad), -1e30, jnp.float32).at[:, :C].set(
        params["b3"].reshape(1, C).astype(jnp.float32))

    lab = jnp.zeros((B_pad,), jnp.int32).at[:B].set(labels.astype(jnp.int32).reshape(B))
    wts = jnp.zeros((B_pad,), jnp.float32).at[:B].set(weights.astype(jnp.float32).reshape(B))
    lab_b = jnp.broadcast_to(lab[:, None], (B_pad, C_pad))      # lane-dense
    wts_b = jnp.broadcast_to(wts[:, None], (B_pad, 128))        # lane-dense

    logits_pad, losses_pad = pl.pallas_call(
        _mlp_ce_kernel,
        out_shape=(jax.ShapeDtypeStruct((B_pad, C_pad), jnp.float32),
                   jax.ShapeDtypeStruct((B_pad, 128), jnp.float32)),
        compiler_params=pltpu.CompilerParams(vmem_limit_bytes=vmem_limit),
    )(pooled_sum, mask_cnt, w1, b1, w2, b2, w3, b3, lab_b, wts_b)

    outputs = {"logits": logits_pad[:B, :C]}
    if has_labels:
        # torch: CrossEntropyLoss(reduction='none') -> (losses * weights).mean()
        loss = jnp.mean(losses_pad[:B, 0])
        outputs["loss"] = loss
        outputs["classification_loss"] = loss
    return outputs


def init_params(key, encoder_dim, hidden_dim, num_classes):
    """Deterministic synthetic init for the classifier head (matches the nn.Linear stack)."""
    k1, k2, k3, k4, k5, k6 = jax.random.split(key, 6)
    s1 = 1.0 / jnp.sqrt(encoder_dim)
    s2 = 1.0 / jnp.sqrt(hidden_dim)
    return {
        "w1": jax.random.uniform(k1, (encoder_dim, hidden_dim), jnp.float32, -s1, s1),
        "b1": jax.random.uniform(k2, (1, hidden_dim), jnp.float32, -s1, s1),
        "w2": jax.random.uniform(k3, (hidden_dim, hidden_dim), jnp.float32, -s2, s2),
        "b2": jax.random.uniform(k4, (1, hidden_dim), jnp.float32, -s2, s2),
        "w3": jax.random.uniform(k5, (hidden_dim, num_classes), jnp.float32, -s2, s2),
        "b3": jax.random.uniform(k6, (1, num_classes), jnp.float32, -s2, s2),
    }


if __name__ == "__main__":
    # Small shapes that still exercise multi-tile grids and every padding path:
    #   B=6 -> 2 batch tiles of 3; S=200 with max_seq_tile=128 -> 2 sequence steps
    #   (56 masked pad positions); C=3 -> 125 padded class columns.
    B, S, D, H, C = 6, 200, 32, 32, 3

    key = jax.random.PRNGKey(0)
    k_h, k_p = jax.random.split(key, 2)

    # Synthetic stand-in for EsmModel(...).last_hidden_state (external pretrained
    # encoder, not reproduced).  bf16: the kernel streams the encoder's native dtype.
    hidden_states = jax.random.normal(k_h, (B, S, D), jnp.float32).astype(jnp.bfloat16)
    lengths = jnp.array([200, 137, 64, 200, 5, 181], dtype=jnp.int32)
    attention_mask = (jnp.arange(S)[None, :] < lengths[:, None]).astype(jnp.float32)
    labels = jnp.array([0, 1, 2, 1, 0, 2], dtype=jnp.int32)
    weights = jnp.array([1.0, 2.0, 0.5, 1.0, 3.0, 1.5], dtype=jnp.float32)

    params = init_params(k_p, D, H, C)

    out = amp_classifier_forward(hidden_states, attention_mask, params,
                                 labels, weights, max_seq_tile=128)
    jax.block_until_ready(out)

    # Pure-JAX reference mirroring the kernel's numerics (f32 accumulation over the
    # bf16 encoder output; bf16 weights / bf16-fed matmuls with f32 accumulate).
    hs = hidden_states.astype(jnp.float32)
    mk = attention_mask.astype(jnp.float32)
    sum_emb = jnp.einsum("bs,bsd->bd", mk, hs)
    cnt = jnp.maximum(mk.sum(1, keepdims=True), 1e-9)
    pooled = sum_emb / cnt

    def mm(x, w):
        return jnp.dot(x.astype(jnp.bfloat16).astype(jnp.float32),
                       w.astype(jnp.bfloat16).astype(jnp.float32))

    x = jnp.maximum(mm(pooled, params["w1"]) + params["b1"], 0.0)
    x = jnp.maximum(mm(x, params["w2"]) + params["b2"], 0.0)
    ref_logits = mm(x, params["w3"]) + params["b3"]
    ref_logp = ref_logits - jax.nn.logsumexp(ref_logits, axis=-1, keepdims=True)
    ref_losses = -jnp.take_along_axis(ref_logp, labels[:, None], axis=-1)[:, 0]
    ref_loss = jnp.mean(ref_losses * weights)

    assert out["logits"].shape == (B, C), "logits shape mismatch"
    assert jnp.allclose(out["logits"], ref_logits, atol=5e-2, rtol=5e-2), "logits mismatch"
    assert jnp.allclose(out["loss"], ref_loss, atol=5e-2, rtol=5e-2), "loss mismatch"
    print("KERNEL_OK")
</pallas_src>

<mosaic_0001>
module attributes {stable_mosaic.version = 11 : i64} {
  func.func @_pool_kernel(%arg0: i32, %arg1: i32, %arg2: memref<3x128x32xbf16, #tpu.memory_space<vmem>>, %arg3: memref<3x1x128xbf16, #tpu.memory_space<vmem>>, %arg4: memref<3x1x32xf32, #tpu.memory_space<vmem>>, %arg5: memref<3x1x128xf32, #tpu.memory_space<vmem>>) attributes {dimension_semantics = [#tpu.dimension_semantics<parallel>, #tpu.dimension_semantics<arbitrary>], iteration_bounds = array<i64: 2, 2>, scalar_prefetch = 0 : i64, scratch_operands = 0 : i64, tpu.core_type = #tpu.core_type<tc>, window_params = [{transform_indices = @transform_0, window_bounds = array<i64: 3, 128, 32>}, {transform_indices = @transform_1, window_bounds = array<i64: 3, 1, 128>}, {transform_indices = @transform_2, window_bounds = array<i64: 3, 1, 32>}, {transform_indices = @transform_3, window_bounds = array<i64: 3, 1, 128>}]} {
    %c0_i32 = arith.constant 0 : i32
    %0 = arith.cmpi eq, %arg1, %c0_i32 : i32
    %1 = arith.extui %0 : i1 to i32
    %c0_i32_0 = arith.constant 0 : i32
    %2 = arith.cmpi ne, %1, %c0_i32_0 : i32
    scf.if %2 {
      %cst_19 = arith.constant 0.000000e+00 : f32
      %17 = vector.broadcast %cst_19 : f32 to vector<3x1x32xf32>
      %c0_20 = arith.constant 0 : index
      %c0_21 = arith.constant 0 : index
      %c0_22 = arith.constant 0 : index
      %18 = vector.load %arg4[%c0_20, %c0_21, %c0_22] : memref<3x1x32xf32, #tpu.memory_space<vmem>>, vector<3x1x32xf32>
      tpu.vector_store %arg4[%c0_20, %c0_21, %c0_22], %17 {strides = array<i32>} : memref<3x1x32xf32, #tpu.memory_space<vmem>>, vector<3x1x32xf32>,
      %cst_23 = arith.constant 0.000000e+00 : f32
      %19 = vector.broadcast %cst_23 : f32 to vector<3x1x128xf32>
      %c0_24 = arith.constant 0 : index
      %c0_25 = arith.constant 0 : index
      %c0_26 = arith.constant 0 : index
      %20 = vector.load %arg5[%c0_24, %c0_25, %c0_26] : memref<3x1x128xf32, #tpu.memory_space<vmem>>, vector<3x1x128xf32>
      tpu.vector_store %arg5[%c0_24, %c0_25, %c0_26], %19 {strides = array<i32>} : memref<3x1x128xf32, #tpu.memory_space<vmem>>, vector<3x1x128xf32>,
    } else {
    }
    %c0 = arith.constant 0 : index
    %c0_1 = arith.constant 0 : index
    %c0_2 = arith.constant 0 : index
    %3 = vector.load %arg2[%c0, %c0_1, %c0_2] : memref<3x128x32xbf16, #tpu.memory_space<vmem>>, vector<3x128x32xbf16>
    %c0_3 = arith.constant 0 : index
    %c0_4 = arith.constant 0 : index
    %c0_5 = arith.constant 0 : index
    %4 = vector.load %arg3[%c0_3, %c0_4, %c0_5] : memref<3x1x128xbf16, #tpu.memory_space<vmem>>, vector<3x1x128xbf16>
    %c0_6 = arith.constant 0 : index
    %c0_7 = arith.constant 0 : index
    %c0_8 = arith.constant 0 : index
    %5 = vector.load %arg4[%c0_6, %c0_7, %c0_8] : memref<3x1x32xf32, #tpu.memory_space<vmem>>, vector<3x1x32xf32>
    "tpu.trace_start"() <{level = 10 : i32, message = "bqs,bsd->bqd"}> : () -> ()
    %cst = arith.constant dense<0.000000e+00> : vector<3x1x32xf32>
    %6 = tpu.matmul %4, %3, %cst {dimension_numbers = #tpu.dot_dimension_numbers<[2], [1], [1], [2], [0, 0, 0, 1, 1, 2], [0], [0]>} : vector<3x1x128xbf16>, vector<3x128x32xbf16>, vector<3x1x32xf32> -> vector<3x1x32xf32>
    "tpu.trace_stop"() : () -> ()
    %7 = arith.addf %5, %6 : vector<3x1x32xf32>
    %c0_9 = arith.constant 0 : index
    %c0_10 = arith.constant 0 : index
    %c0_11 = arith.constant 0 : index
    %8 = vector.load %arg4[%c0_9, %c0_10, %c0_11] : memref<3x1x32xf32, #tpu.memory_space<vmem>>, vector<3x1x32xf32>
    tpu.vector_store %arg4[%c0_9, %c0_10, %c0_11], %7 {strides = array<i32>} : memref<3x1x32xf32, #tpu.memory_space<vmem>>, vector<3x1x32xf32>,
    %9 = arith.extf %4 : vector<3x1x128xbf16> to vector<3x1x128xf32>
    %cst_12 = arith.constant dense<0.000000e+00> : vector<3x1xf32>
    %10 = vector.multi_reduction <add>, %9, %cst_12 [2] : vector<3x1x128xf32> to vector<3x1xf32>
    %11 = vector.shape_cast %10 : vector<3x1xf32> to vector<3x1x1xf32>
    %c0_13 = arith.constant 0 : index
    %c0_14 = arith.constant 0 : index
    %c0_15 = arith.constant 0 : index
    %12 = vector.load %arg5[%c0_13, %c0_14, %c0_15] : memref<3x1x128xf32, #tpu.memory_space<vmem>>, vector<3x1x128xf32>
    %13 = vector.shape_cast %11 : vector<3x1x1xf32> to vector<3x1x1xf32>
    %14 = vector.broadcast %13 : vector<3x1x1xf32> to vector<3x1x128xf32>
    %15 = arith.addf %12, %14 : vector<3x1x128xf32>
    %c0_16 = arith.constant 0 : index
    %c0_17 = arith.constant 0 : index
    %c0_18 = arith.constant 0 : index
    %16 = vector.load %arg5[%c0_16, %c0_17, %c0_18] : memref<3x1x128xf32, #tpu.memory_space<vmem>>, vector<3x1x128xf32>
    tpu.vector_store %arg5[%c0_16, %c0_17, %c0_18], %15 {strides = array<i32>} : memref<3x1x128xf32, #tpu.memory_space<vmem>>, vector<3x1x128xf32>,
    return
  }
  func.func @transform_0(%arg0: i32, %arg1: i32) -> (i32, i32, i32) {
    %c0_i32 = arith.constant 0 : i32
    %c0_i32_0 = arith.constant 0 : i32
    return %arg0, %arg1, %c0_i32 : i32, i32, i32
  }
  func.func @transform_1(%arg0: i32, %arg1: i32) -> (i32, i32, i32) {
    %c0_i32 = arith.constant 0 : i32
    %c0_i32_0 = arith.constant 0 : i32
    return %arg0, %c0_i32, %arg1 : i32, i32, i32
  }
  func.func @transform_2(%arg0: i32, %arg1: i32) -> (i32, i32, i32) {
    %c0_i32 = arith.constant 0 : i32
    %c0_i32_0 = arith.constant 0 : i32
    %c0_i32_1 = arith.constant 0 : i32
    return %arg0, %c0_i32, %c0_i32_0 : i32, i32, i32
  }
  func.func @transform_3(%arg0: i32, %arg1: i32) -> (i32, i32, i32) {
    %c0_i32 = arith.constant 0 : i32
    %c0_i32_0 = arith.constant 0 : i32
    %c0_i32_1 = arith.constant 0 : i32
    return %arg0, %c0_i32, %c0_i32_0 : i32, i32, i32
  }
}

</mosaic_0001>

<llo_original>
// kernel: tpu_custom_call.1
$region0: #{tpu_custom_call.1}
  #allocation0 [shape = 'u32[]', space=smem, size = 0x4, offset = 0x4, fixed_abs, tag = 'smem constant byte address 0x4 - core index']
  #allocation1 [shape = 'u32[144,128]{1,0:T(1,128)}', space=vmem, size = 0x12000, scoped, tag = 'internal scratch']
  %s0 = inlined_call_operand.vmem [shape: bf16[6,256,32], index: 0, kind: input, shape index: {}]
  %s1 = inlined_call_operand.vmem [shape: bf16[6,1,256], index: 1, kind: input, shape index: {}]
  %s2 = inlined_call_operand.hbm [shape: f32[6,1,32], index: 2, kind: output, shape index: {0}]
  %s3 = inlined_call_operand.hbm [shape: f32[6,1,128], index: 3, kind: output, shape index: {1}]
  %4 = xla_tuple %s2, %s3
  %s5 = sld [smem:[#allocation0]]
  $region128: #{tpu_custom_call.1} parent=0
    _
  %s7 = ssub.s32 1, %s5
  %s8 = scalar_select 0, %s7, %s5
  $region1: #{tpu_custom_call.1} parent=0
    #allocation2 [shape = 'u8[196608]{0}', space=vmem, size = 0x30000, scoped, tag = 'input window, operand 0']
    #allocation3 [shape = 'u8[3072]{0}', space=vmem, size = 0xc00, scoped, tag = 'input window, operand 1']
    #allocation4 [shape = 'u8[3072]{0}', space=vmem, size = 0xc00, scoped, tag = 'output window, operand 0']
    #allocation5 [shape = 's32[2]{0}', space=sflag, size = 0x8, scoped, tag = 'scoped memory for tpu_custom_call.1']
    #allocation6 [shape = 'u8[3072]{0}', space=vmem, size = 0xc00, scoped, tag = 'output window, operand 1']
    #allocation7 [shape = 's32[2]{0}', space=sflag, size = 0x8, scoped, tag = 'scoped memory for tpu_custom_call.1']
    %9 = vsyncpa [#allocation5], 0
    %s10 = scalar_lea.sflag [#allocation5], 1
    %11 = vsyncpa %s10, 0
    %12 = vsyncpa [#allocation7], 0
    %s13 = scalar_lea.sflag [#allocation7], 1
    %14 = vsyncpa %s13, 0
    loop: start=0, step=1, limit=6
    $region2: #{tpu_custom_call.1} parent=1 // loop_pre_header
      _
    $region3: #{tpu_custom_call.1} parent=1 // loop_header
      %s16 = sphi 0, %s20
      %p17 = scmp.ge.s32.totalorder %s16, 6
      %s23 = sphi 0, %s35
      %s24 = sphi 0, %s31
      %s25 = sphi 0, %s23
      %s26 = sphi 0, %s24
      %s27 = sphi 0, %s25
      %s28 = sphi 0, %s26
      %s40 = sphi 0, %s42
      %s43 = sphi 0, %s40
      %s44 = sphi 0, %s43
      %s60 = sphi 0, %s44
      %s68 = sphi 0, %s70
      %s71 = sphi 0, %s68
      %s72 = sphi 0, %s71
      %s88 = sphi 0, %s72
      %s94 = sphi 0, %s96
      %s97 = sphi 0, %s94
      %s98 = sphi 0, %s97
      %s114 = sphi 0, %s98
      %s120 = sphi 0, %s122
      %s123 = sphi 0, %s120
      %s124 = sphi 0, %s123
      %s140 = sphi 0, %s124
    $region4: #{tpu_custom_call.1} parent=1 // loop_header_branch
      %19 = sbr.rel (%p17) target = $region8
    $region5: #{tpu_custom_call.1} parent=1 // loop_body
      %s21 = ssub.s32 %s16, 1
      %s22 = ssub.s32 %s16, 2
      %s29 = sadd.s32 1, %s24
      %p30 = scmp.ge.s32.totalorder %s29, 2
      %s31 = scalar_select %p30, 0, %s29
      %s32 = sadd.s32 1, %s23
      %s33 = scalar_select %p30, %s32, %s23
      %p34 = scmp.ge.s32.totalorder %s33, 2
      %s35 = scalar_select %p34, 0, %s33
      %s36 = ssub.s32 %s23, %s35
      %s37 = ssub.s32 %s24, %s31
      %s38 = sor.u32 %s36, %s37
      %p39 = scmp.eq.s32.totalorder %s38, 0
      %s41 = sadd.s32 %s40, 1
      %s42 = scalar_select %p39, %s40, %s41
      %p45 = pneg %p39
      %p46 = scmp.eq.s32.totalorder %s16, 3
      %p47 = por %p45, %p46
      %p48 = scmp.ne.s32.totalorder %s40, %s43
      %p49 = scmp.eq.s32.totalorder %s16, 0
      %p50 = por %p48, %p49
      %p51 = scmp.ne.s32.totalorder %s40, %s43
      %p52 = scmp.eq.s32.totalorder %s21, 3
      %p53 = por %p51, %p52
      %p54 = scmp.ne.s32.totalorder %s43, %s44
      %p55 = scmp.eq.s32.totalorder %s21, 0
      %p56 = por %p54, %p55
      %p57 = scmp.ne.s32.totalorder %s43, %s44
      %p58 = scmp.eq.s32.totalorder %s22, 3
      %p59 = por %p57, %p58
      %p61 = scmp.ne.s32.totalorder %s44, %s60
      %p62 = scmp.eq.s32.totalorder %s22, 0
      %p63 = por %p61, %p62
      %s64 = ssub.s32 %s23, %s35
      %s65 = ssub.s32 %s24, %s31
      %s66 = sor.u32 %s64, %s65
      %p67 = scmp.eq.s32.totalorder %s66, 0
      %s69 = sadd.s32 %s68, 1
      %s70 = scalar_select %p67, %s68, %s69
      %p73 = pneg %p67
      %p74 = scmp.eq.s32.totalorder %s16, 3
      %p75 = por %p73, %p74
      %p76 = scmp.ne.s32.totalorder %s68, %s71
      %p77 = scmp.eq.s32.totalorder %s16, 0
      %p78 = por %p76, %p77
      %p79 = scmp.ne.s32.totalorder %s68, %s71
      %p80 = scmp.eq.s32.totalorder %s21, 3
      %p81 = por %p79, %p80
      %p82 = scmp.ne.s32.totalorder %s71, %s72
      %p83 = scmp.eq.s32.totalorder %s21, 0
      %p84 = por %p82, %p83
      %p85 = scmp.ne.s32.totalorder %s71, %s72
      %p86 = scmp.eq.s32.totalorder %s22, 3
      %p87 = por %p85, %p86
      %p89 = scmp.ne.s32.totalorder %s72, %s88
      %p90 = scmp.eq.s32.totalorder %s22, 0
      %p91 = por %p89, %p90
      %s92 = ssub.s32 %s23, %s35
      %p93 = scmp.eq.s32.totalorder %s92, 0
      %s95 = sadd.s32 %s94, 1
      %s96 = scalar_select %p93, %s94, %s95
      %p99 = pneg %p93
      %p100 = scmp.eq.s32.totalorder %s16, 3
      %p101 = por %p99, %p100
      %p102 = scmp.ne.s32.totalorder %s94, %s97
      %p103 = scmp.eq.s32.totalorder %s16, 0
      %p104 = por %p102, %p103
      %p105 = scmp.ne.s32.totalorder %s94, %s97
      %p106 = scmp.eq.s32.totalorder %s21, 3
      %p107 = por %p105, %p106
      %p108 = scmp.ne.s32.totalorder %s97, %s98
      %p109 = scmp.eq.s32.totalorder %s21, 0
      %p110 = por %p108, %p109
      %p111 = scmp.ne.s32.totalorder %s97, %s98
      %p112 = scmp.eq.s32.totalorder %s22, 3
      %p113 = por %p111, %p112
      %p115 = scmp.ne.s32.totalorder %s98, %s114
      %p116 = scmp.eq.s32.totalorder %s22, 0
      %p117 = por %p115, %p116
      %s118 = ssub.s32 %s23, %s35
      %p119 = scmp.eq.s32.totalorder %s118, 0
      %s121 = sadd.s32 %s120, 1
      %s122 = scalar_select %p119, %s120, %s121
      %p125 = pneg %p119
      %p126 = scmp.eq.s32.totalorder %s16, 3
      %p127 = por %p125, %p126
      %p128 = scmp.ne.s32.totalorder %s120, %s123
      %p129 = scmp.eq.s32.totalorder %s16, 0
      %p130 = por %p128, %p129
      %p131 = scmp.ne.s32.totalorder %s120, %s123
      %p132 = scmp.eq.s32.totalorder %s21, 3
      %p133 = por %p131, %p132
      %p134 = scmp.ne.s32.totalorder %s123, %s124
      %p135 = scmp.eq.s32.totalorder %s21, 0
      %p136 = por %p134, %p135
      %p137 = scmp.ne.s32.totalorder %s123, %s124
      %p138 = scmp.eq.s32.totalorder %s22, 3
      %p139 = por %p137, %p138
      %p141 = scmp.ne.s32.totalorder %s124, %s140
      %p142 = scmp.eq.s32.totalorder %s22, 0
      %p143 = por %p141, %p142
      %p144 = scmp.le.s32.totalorder 1, %s16
      %p145 = scmp.lt.s32.totalorder %s16, 5
      %p146 = pnand %p144, %p145
      %p147 = pneg %p146
      // Predicated region
      $region9: #{tpu_custom_call.1} parent=5 // pred_check
        _
      $region10: #{tpu_custom_call.1} parent=5 // pred_check_branch
        %149 = sbr.rel (%p146) target = $region12
      $region11: #{tpu_custom_call.1} parent=5 // pred_region
        %s150 = ssub.s32 %s16, 1
      $region12: #{tpu_custom_call.1} parent=5 // pred_fallthru
        _
      %p151 = scmp.lt.s32.totalorder %s16, 4
      // Predicated region
      $region13: #{tpu_custom_call.1} parent=5 // pred_check
        %p152 = pneg %p151
      $region14: #{tpu_custom_call.1} parent=5 // pred_check_branch
        %154 = sbr.rel (%p152) target = $region16
      $region15: #{tpu_custom_call.1} parent=5 // pred_region
        // Predicated region
        $region17: #{tpu_custom_call.1} parent=15 // pred_check
          %p155 = pneg %p50
        $region18: #{tpu_custom_call.1} parent=15 // pred_check_branch
          %157 = sbr.rel (%p155) target = $region20
        $region19: #{tpu_custom_call.1} parent=15 // pred_region
          %s158 = sand.u32 %s40, 1
          %s159 = sand.u32 %s40, 1
          %s160 = smul.addr %s159, 192
          %s161 = scalar_lea.vmem [#allocation2], %s160
          %s162 = smul.u32 3, %s23
          %s163 = smul.u32 16, %s24
          %s164 = smul.addr %s162, 32
          %s165 = sadd.s32 %s163, %s164
          %s166 = smul.addr %s165, 4
          %s167 = scalar_lea.vmem %s0, %s166
          // Predicated region
          $region21: #{tpu_custom_call.1} parent=19 // pred_check
            _
          $region22: #{tpu_custom_call.1} parent=19 // pred_check_branch
            %169 = sbr.rel (0) target = $region24
          $region23: #{tpu_custom_call.1} parent=19 // pred_region
            // Predicated region
            $region25: #{tpu_custom_call.1} parent=23 // pred_check
              _
            $region26: #{tpu_custom_call.1} parent=23 // pred_check_branch
              %171 = sbr.rel target = $region28
            $region27: #{tpu_custom_call.1} parent=23 // pred_region
              // Predicated region
              $region40: #{tpu_custom_call.1} parent=27 // pred_check
                _
              $region41: #{tpu_custom_call.1} parent=27 // pred_check_branch
                %280 = sbr.rel (0) target = $region43
              $region42: #{tpu_custom_call.1} parent=27 // pred_region
                loop: start=0, step=1, limit=1
                $region44: #{tpu_custom_call.1} parent=42 // loop_pre_header
                  _
                $region45: #{tpu_custom_call.1} parent=42 // loop_header
                  %s282 = sphi 0, %s286
                  %p283 = scmp.ge.s32.totalorder %s282, 1
                  %s287 = sphi %s167, %s167
                  %s288 = sphi %s161, %s161
                $region46: #{tpu_custom_call.1} parent=42 // loop_header_branch
                  %285 = sbr.rel (%p283) target = $region50
                $region47: #{tpu_custom_call.1} parent=42 // loop_body
                  _
                $region48: #{tpu_custom_call.1} parent=42 // loop_footer
                  %s286 = sadd.s32 1, %s282
                $region49: #{tpu_custom_call.1} parent=42 // loop_footer_branch
                  %281 = sbr.rel target = $region45
                $region50: #{tpu_custom_call.1} parent=42 // loop_exit
                  _
                loop: start=0, step=1, limit=1
                $region51: #{tpu_custom_call.1} parent=42 // loop_pre_header
                  _
                $region52: #{tpu_custom_call.1} parent=42 // loop_header
                  %s291 = sphi 0, %s295
                  %p292 = scmp.ge.s32.totalorder %s291, 1
                  %s296 = sphi %s167, %s167
                  %s297 = sphi %s161, %s161
                $region53: #{tpu_custom_call.1} parent=42 // loop_header_branch
                  %294 = sbr.rel (%p292) target = $region57
                $region54: #{tpu_custom_call.1} parent=42 // loop_body
                  %v298 = vld [vmem:[%s296] sm:$0xf]
                  %299 = vst [vmem:[%s297] sm:$0xf] %v298
                  %v300 = vld [vmem:[%s296 + $0x4] sm:$0xf]
                  %301 = vst [vmem:[%s297 + $0x4] sm:$0xf] %v300
                  %v302 = vld [vmem:[%s296 + $0x8] sm:$0xf]
                  %303 = vst [vmem:[%s297 + $0x8] sm:$0xf] %v302
                  %v304 = vld [vmem:[%s296 + $0xc] sm:$0xf]
                  %305 = vst [vmem:[%s297 + $0xc] sm:$0xf] %v304
                  %v306 = vld [vmem:[%s296 + $0x10] sm:$0xf]
                  %307 = vst [vmem:[%s297 + $0x10] sm:$0xf] %v306
                  %v308 = vld [vmem:[%s296 + $0x14] sm:$0xf]
                  %309 = vst [vmem:[%s297 + $0x14] sm:$0xf] %v308
                  %v310 = vld [vmem:[%s296 + $0x18] sm:$0xf]
                  %311 = vst [vmem:[%s297 + $0x18] sm:$0xf] %v310
                  %v312 = vld [vmem:[%s296 + $0x1c] sm:$0xf]
                  %313 = vst [vmem:[%s297 + $0x1c] sm:$0xf] %v312
                  %v314 = vld [vmem:[%s296 + $0x20] sm:$0xf]
                  %315 = vst [vmem:[%s297 + $0x20] sm:$0xf] %v314
                  %v316 = vld [vmem:[%s296 + $0x24] sm:$0xf]
                  %317 = vst [vmem:[%s297 + $0x24] sm:$0xf] %v316
                  %v318 = vld [vmem:[%s296 + $0x28] sm:$0xf]
                  %319 = vst [vmem:[%s297 + $0x28] sm:$0xf] %v318
                  %v320 = vld [vmem:[%s296 + $0x2c] sm:$0xf]
                  %321 = vst [vmem:[%s297 + $0x2c] sm:$0xf] %v320
                  %v322 = vld [vmem:[%s296 + $0x30] sm:$0xf]
                  %323 = vst [vmem:[%s297 + $0x30] sm:$0xf] %v322
                  %v324 = vld [vmem:[%s296 + $0x34] sm:$0xf]
                  %325 = vst [vmem:[%s297 + $0x34] sm:$0xf] %v324
                  %v326 = vld [vmem:[%s296 + $0x38] sm:$0xf]
                  %327 = vst [vmem:[%s297 + $0x38] sm:$0xf] %v326
                  %v328 = vld [vmem:[%s296 + $0x3c] sm:$0xf]
                  %329 = vst [vmem:[%s297 + $0x3c] sm:$0xf] %v328
                  %v330 = vld [vmem:[%s296 + $0x80] sm:$0xf]
                  %331 = vst [vmem:[%s297 + $0x40] sm:$0xf] %v330
                  %v332 = vld [vmem:[%s296 + $0x84] sm:$0xf]
                  %333 = vst [vmem:[%s297 + $0x44] sm:$0xf] %v332
                  %v334 = vld [vmem:[%s296 + $0x88] sm:$0xf]
                  %335 = vst [vmem:[%s297 + $0x48] sm:$0xf] %v334
                  %v336 = vld [vmem:[%s296 + $0x8c] sm:$0xf]
                  %337 = vst [vmem:[%s297 + $0x4c] sm:$0xf] %v336
                  %v338 = vld [vmem:[%s296 + $0x90] sm:$0xf]
                  %339 = vst [vmem:[%s297 + $0x50] sm:$0xf] %v338
                  %v340 = vld [vmem:[%s296 + $0x94] sm:$0xf]
                  %341 = vst [vmem:[%s297 + $0x54] sm:$0xf] %v340
                  %v342 = vld [vmem:[%s296 + $0x98] sm:$0xf]
                  %343 = vst [vmem:[%s297 + $0x58] sm:$0xf] %v342
                  %v344 = vld [vmem:[%s296 + $0x9c] sm:$0xf]
                  %345 = vst [vmem:[%s297 + $0x5c] sm:$0xf] %v344
                  %v346 = vld [vmem:[%s296 + $0xa0] sm:$0xf]
                  %347 = vst [vmem:[%s297 + $0x60] sm:$0xf] %v346
                  %v348 = vld [vmem:[%s296 + $0xa4] sm:$0xf]
                  %349 = vst [vmem:[%s297 + $0x64] sm:$0xf] %v348
                  %v350 = vld [vmem:[%s296 + $0xa8] sm:$0xf]
                  %351 = vst [vmem:[%s297 + $0x68] sm:$0xf] %v350
                  %v352 = vld [vmem:[%s296 + $0xac] sm:$0xf]
                  %353 = vst [vmem:[%s297 + $0x6c] sm:$0xf] %v352
                  %v354 = vld [vmem:[%s296 + $0xb0] sm:$0xf]
                  %355 = vst [vmem:[%s297 + $0x70] sm:$0xf] %v354
                  %v356 = vld [vmem:[%s296 + $0xb4] sm:$0xf]
                  %357 = vst [vmem:[%s297 + $0x74] sm:$0xf] %v356
                  %v358 = vld [vmem:[%s296 + $0xb8] sm:$0xf]
                  %359 = vst [vmem:[%s297 + $0x78] sm:$0xf] %v358
                  %v360 = vld [vmem:[%s296 + $0xbc] sm:$0xf]
                  %361 = vst [vmem:[%s297 + $0x7c] sm:$0xf] %v360
                  %v362 = vld [vmem:[%s296 + $0x100] sm:$0xf]
                  %363 = vst [vmem:[%s297 + $0x80] sm:$0xf] %v362
                  %v364 = vld [vmem:[%s296 + $0x104] sm:$0xf]
                  %365 = vst [vmem:[%s297 + $0x84] sm:$0xf] %v364
                  %v366 = vld [vmem:[%s296 + $0x108] sm:$0xf]
                  %367 = vst [vmem:[%s297 + $0x88] sm:$0xf] %v366
                  %v368 = vld [vmem:[%s296 + $0x10c] sm:$0xf]
                  %369 = vst [vmem:[%s297 + $0x8c] sm:$0xf] %v368
                  %v370 = vld [vmem:[%s296 + $0x110] sm:$0xf]
                  %371 = vst [vmem:[%s297 + $0x90] sm:$0xf] %v370
                  %v372 = vld [vmem:[%s296 + $0x114] sm:$0xf]
                  %373 = vst [vmem:[%s297 + $0x94] sm:$0xf] %v372
                  %v374 = vld [vmem:[%s296 + $0x118] sm:$0xf]
                  %375 = vst [vmem:[%s297 + $0x98] sm:$0xf] %v374
                  %v376 = vld [vmem:[%s296 + $0x11c] sm:$0xf]
                  %377 = vst [vmem:[%s297 + $0x9c] sm:$0xf] %v376
                  %v378 = vld [vmem:[%s296 + $0x120] sm:$0xf]
                  %379 = vst [vmem:[%s297 + $0xa0] sm:$0xf] %v378
                  %v380 = vld [vmem:[%s296 + $0x124] sm:$0xf]
                  %381 = vst [vmem:[%s297 + $0xa4] sm:$0xf] %v380
                  %v382 = vld [vmem:[%s296 + $0x128] sm:$0xf]
                  %383 = vst [vmem:[%s297 + $0xa8] sm:$0xf] %v382
                  %v384 = vld [vmem:[%s296 + $0x12c] sm:$0xf]
                  %385 = vst [vmem:[%s297 + $0xac] sm:$0xf] %v384
                  %v386 = vld [vmem:[%s296 + $0x130] sm:$0xf]
                  %387 = vst [vmem:[%s297 + $0xb0] sm:$0xf] %v386
                  %v388 = vld [vmem:[%s296 + $0x134] sm:$0xf]
                  %389 = vst [vmem:[%s297 + $0xb4] sm:$0xf] %v388
                  %v390 = vld [vmem:[%s296 + $0x138] sm:$0xf]
                  %391 = vst [vmem:[%s297 + $0xb8] sm:$0xf] %v390
                  %v392 = vld [vmem:[%s296 + $0x13c] sm:$0xf]
                  %393 = vst [vmem:[%s297 + $0xbc] sm:$0xf] %v392
                $region55: #{tpu_custom_call.1} parent=42 // loop_footer
                  %s295 = sadd.s32 1, %s291
                $region56: #{tpu_custom_call.1} parent=42 // loop_footer_branch
                  %290 = sbr.rel target = $region52
                $region57: #{tpu_custom_call.1} parent=42 // loop_exit
                  _
              $region43: #{tpu_custom_call.1} parent=27 // pred_fallthru
                _
            $region28: #{tpu_custom_call.1} parent=23 // pred_fallthru
              _
            // Predicated region
            $region29: #{tpu_custom_call.1} parent=23 // pred_check
              _
            $region30: #{tpu_custom_call.1} parent=23 // pred_check_branch
              %173 = sbr.rel (0) target = $region32
            $region31: #{tpu_custom_call.1} parent=23 // pred_region
              loop: start=0, step=1, limit=1
              $region33: #{tpu_custom_call.1} parent=31 // loop_pre_header
                _
              $region34: #{tpu_custom_call.1} parent=31 // loop_header
                %s176 = sphi 0, %s180
                %p177 = scmp.ge.s32.totalorder %s176, 1
                %s181 = sphi %s167, %s167
                %s182 = sphi %s161, %s161
              $region35: #{tpu_custom_call.1} parent=31 // loop_header_branch
                %179 = sbr.rel (%p177) target = $region39
              $region36: #{tpu_custom_call.1} parent=31 // loop_body
                %v183 = vld [vmem:[%s181] sm:$0xf]
                %184 = vst [vmem:[%s182] sm:$0xf] %v183
                %v185 = vld [vmem:[%s181 + $0x4] sm:$0xf]
                %186 = vst [vmem:[%s182 + $0x4] sm:$0xf] %v185
                %v187 = vld [vmem:[%s181 + $0x8] sm:$0xf]
                %188 = vst [vmem:[%s182 + $0x8] sm:$0xf] %v187
                %v189 = vld [vmem:[%s181 + $0xc] sm:$0xf]
                %190 = vst [vmem:[%s182 + $0xc] sm:$0xf] %v189
                %v191 = vld [vmem:[%s181 + $0x10] sm:$0xf]
                %192 = vst [vmem:[%s182 + $0x10] sm:$0xf] %v191
                %v193 = vld [vmem:[%s181 + $0x14] sm:$0xf]
                %194 = vst [vmem:[%s182 + $0x14] sm:$0xf] %v193
                %v195 = vld [vmem:[%s181 + $0x18] sm:$0xf]
                %196 = vst [vmem:[%s182 + $0x18] sm:$0xf] %v195
                %v197 = vld [vmem:[%s181 + $0x1c] sm:$0xf]
                %198 = vst [vmem:[%s182 + $0x1c] sm:$0xf] %v197
                %v199 = vld [vmem:[%s181 + $0x20] sm:$0xf]
                %200 = vst [vmem:[%s182 + $0x20] sm:$0xf] %v199
                %v201 = vld [vmem:[%s181 + $0x24] sm:$0xf]
                %202 = vst [vmem:[%s182 + $0x24] sm:$0xf] %v201
                %v203 = vld [vmem:[%s181 + $0x28] sm:$0xf]
                %204 = vst [vmem:[%s182 + $0x28] sm:$0xf] %v203
                %v205 = vld [vmem:[%s181 + $0x2c] sm:$0xf]
                %206 = vst [vmem:[%s182 + $0x2c] sm:$0xf] %v205
                %v207 = vld [vmem:[%s181 + $0x30] sm:$0xf]
                %208 = vst [vmem:[%s182 + $0x30] sm:$0xf] %v207
                %v209 = vld [vmem:[%s181 + $0x34] sm:$0xf]
                %210 = vst [vmem:[%s182 + $0x34] sm:$0xf] %v209
                %v211 = vld [vmem:[%s181 + $0x38] sm:$0xf]
                %212 = vst [vmem:[%s182 + $0x38] sm:$0xf] %v211
                %v213 = vld [vmem:[%s181 + $0x3c] sm:$0xf]
                %214 = vst [vmem:[%s182 + $0x3c] sm:$0xf] %v213
                %v215 = vld [vmem:[%s181 + $0x80] sm:$0xf]
                %216 = vst [vmem:[%s182 + $0x40] sm:$0xf] %v215
                %v217 = vld [vmem:[%s181 + $0x84] sm:$0xf]
                %218 = vst [vmem:[%s182 + $0x44] sm:$0xf] %v217
                %v219 = vld [vmem:[%s181 + $0x88] sm:$0xf]
                %220 = vst [vmem:[%s182 + $0x48] sm:$0xf] %v219
                %v221 = vld [vmem:[%s181 + $0x8c] sm:$0xf]
                %222 = vst [vmem:[%s182 + $0x4c] sm:$0xf] %v221
                %v223 = vld [vmem:[%s181 + $0x90] sm:$0xf]
                %224 = vst [vmem:[%s182 + $0x50] sm:$0xf] %v223
                %v225 = vld [vmem:[%s181 + $0x94] sm:$0xf]
                %226 = vst [vmem:[%s182 + $0x54] sm:$0xf] %v225
                %v227 = vld [vmem:[%s181 + $0x98] sm:$0xf]
                %228 = vst [vmem:[%s182 + $0x58] sm:$0xf] %v227
                %v229 = vld [vmem:[%s181 + $0x9c] sm:$0xf]
                %230 = vst [vmem:[%s182 + $0x5c] sm:$0xf] %v229
                %v231 = vld [vmem:[%s181 + $0xa0] sm:$0xf]
                %232 = vst [vmem:[%s182 + $0x60] sm:$0xf] %v231
                %v233 = vld [vmem:[%s181 + $0xa4] sm:$0xf]
                %234 = vst [vmem:[%s182 + $0x64] sm:$0xf] %v233
                %v235 = vld [vmem:[%s181 + $0xa8] sm:$0xf]
                %236 = vst [vmem:[%s182 + $0x68] sm:$0xf] %v235
                %v237 = vld [vmem:[%s181 + $0xac] sm:$0xf]
                %238 = vst [vmem:[%s182 + $0x6c] sm:$0xf] %v237
                %v239 = vld [vmem:[%s181 + $0xb0] sm:$0xf]
                %240 = vst [vmem:[%s182 + $0x70] sm:$0xf] %v239
                %v241 = vld [vmem:[%s181 + $0xb4] sm:$0xf]
                %242 = vst [vmem:[%s182 + $0x74] sm:$0xf] %v241
                %v243 = vld [vmem:[%s181 + $0xb8] sm:$0xf]
                %244 = vst [vmem:[%s182 + $0x78] sm:$0xf] %v243
                %v245 = vld [vmem:[%s181 + $0xbc] sm:$0xf]
                %246 = vst [vmem:[%s182 + $0x7c] sm:$0xf] %v245
                %v247 = vld [vmem:[%s181 + $0x100] sm:$0xf]
                %248 = vst [vmem:[%s182 + $0x80] sm:$0xf] %v247
                %v249 = vld [vmem:[%s181 + $0x104] sm:$0xf]
                %250 = vst [vmem:[%s182 + $0x84] sm:$0xf] %v249
                %v251 = vld [vmem:[%s181 + $0x108] sm:$0xf]
                %252 = vst [vmem:[%s182 + $0x88] sm:$0xf] %v251
                %v253 = vld [vmem:[%s181 + $0x10c] sm:$0xf]
                %254 = vst [vmem:[%s182 + $0x8c] sm:$0xf] %v253
                %v255 = vld [vmem:[%s181 + $0x110] sm:$0xf]
                %256 = vst [vmem:[%s182 + $0x90] sm:$0xf] %v255
                %v257 = vld [vmem:[%s181 + $0x114] sm:$0xf]
                %258 = vst [vmem:[%s182 + $0x94] sm:$0xf] %v257
                %v259 = vld [vmem:[%s181 + $0x118] sm:$0xf]
                %260 = vst [vmem:[%s182 + $0x98] sm:$0xf] %v259
                %v261 = vld [vmem:[%s181 + $0x11c] sm:$0xf]
                %262 = vst [vmem:[%s182 + $0x9c] sm:$0xf] %v261
                %v263 = vld [vmem:[%s181 + $0x120] sm:$0xf]
                %264 = vst [vmem:[%s182 + $0xa0] sm:$0xf] %v263
                %v265 = vld [vmem:[%s181 + $0x124] sm:$0xf]
                %266 = vst [vmem:[%s182 + $0xa4] sm:$0xf] %v265
                %v267 = vld [vmem:[%s181 + $0x128] sm:$0xf]
                %268 = vst [vmem:[%s182 + $0xa8] sm:$0xf] %v267
                %v269 = vld [vmem:[%s181 + $0x12c] sm:$0xf]
                %270 = vst [vmem:[%s182 + $0xac] sm:$0xf] %v269
                %v271 = vld [vmem:[%s181 + $0x130] sm:$0xf]
                %272 = vst [vmem:[%s182 + $0xb0] sm:$0xf] %v271
                %v273 = vld [vmem:[%s181 + $0x134] sm:$0xf]
                %274 = vst [vmem:[%s182 + $0xb4] sm:$0xf] %v273
                %v275 = vld [vmem:[%s181 + $0x138] sm:$0xf]
                %276 = vst [vmem:[%s182 + $0xb8] sm:$0xf] %v275
                %v277 = vld [vmem:[%s181 + $0x13c] sm:$0xf]
                %278 = vst [vmem:[%s182 + $0xbc] sm:$0xf] %v277
              $region37: #{tpu_custom_call.1} parent=31 // loop_footer
                %s180 = sadd.s32 1, %s176
              $region38: #{tpu_custom_call.1} parent=31 // loop_footer_branch
                %175 = sbr.rel target = $region34
              $region39: #{tpu_custom_call.1} parent=31 // loop_exit
                _
            $region32: #{tpu_custom_call.1} parent=23 // pred_fallthru
              _
          $region24: #{tpu_custom_call.1} parent=19 // pred_fallthru
            _
          %394 = vnop
        $region20: #{tpu_custom_call.1} parent=15 // pred_fallthru
          _
        // Predicated region
        $region58: #{tpu_custom_call.1} parent=15 // pred_check
          %p395 = pneg %p78
        $region59: #{tpu_custom_call.1} parent=15 // pred_check_branch
          %397 = sbr.rel (%p395) target = $region61
        $region60: #{tpu_custom_call.1} parent=15 // pred_region
          %s398 = sand.u32 %s68, 1
          %s399 = sand.u32 %s68, 1
          %s400 = smul.addr %s399, 3
          %s401 = scalar_lea.vmem [#allocation3], %s400
          %s402 = smul.u32 3, %s23
          %s403 = smul.addr %s402, 2
          %s404 = sadd.s32 %s24, %s403
          %s405 = scalar_lea.vmem %s1, %s404
          // Predicated region
          $region62: #{tpu_custom_call.1} parent=60 // pred_check
            _
          $region63: #{tpu_custom_call.1} parent=60 // pred_check_branch
            %407 = sbr.rel (0) target = $region65
          $region64: #{tpu_custom_call.1} parent=60 // pred_region
            // Predicated region
            $region66: #{tpu_custom_call.1} parent=64 // pred_check
              _
            $region67: #{tpu_custom_call.1} parent=64 // pred_check_branch
              %409 = sbr.rel target = $region69
            $region68: #{tpu_custom_call.1} parent=64 // pred_region
              // Predicated region
              $region81: #{tpu_custom_call.1} parent=68 // pred_check
                _
              $region82: #{tpu_custom_call.1} parent=68 // pred_check_branch
                %428 = sbr.rel (0) target = $region84
              $region83: #{tpu_custom_call.1} parent=68 // pred_region
                loop: start=0, step=1, limit=1
                $region85: #{tpu_custom_call.1} parent=83 // loop_pre_header
                  _
                $region86: #{tpu_custom_call.1} parent=83 // loop_header
                  %s431 = sphi 0, %s435
                  %p432 = scmp.ge.s32.totalorder %s431, 1
                  %s436 = sphi %s405, %s405
                  %s437 = sphi %s401, %s401
                $region87: #{tpu_custom_call.1} parent=83 // loop_header_branch
                  %434 = sbr.rel (%p432) target = $region91
                $region88: #{tpu_custom_call.1} parent=83 // loop_body
                  %v438 = vld [vmem:[%s436] sm:$0x1]
                  %439 = vst [vmem:[%s437] sm:$0x1] %v438
                  %v440 = vld [vmem:[%s436 + $0x2] sm:$0x1]
                  %441 = vst [vmem:[%s437 + $0x1] sm:$0x1] %v440
                  %v442 = vld [vmem:[%s436 + $0x4] sm:$0x1]
                  %443 = vst [vmem:[%s437 + $0x2] sm:$0x1] %v442
                $region89: #{tpu_custom_call.1} parent=83 // loop_footer
                  %s435 = sadd.s32 1, %s431
                $region90: #{tpu_custom_call.1} parent=83 // loop_footer_branch
                  %430 = sbr.rel target = $region86
                $region91: #{tpu_custom_call.1} parent=83 // loop_exit
                  _
              $region84: #{tpu_custom_call.1} parent=68 // pred_fallthru
                _
            $region69: #{tpu_custom_call.1} parent=64 // pred_fallthru
              _
            // Predicated region
            $region70: #{tpu_custom_call.1} parent=64 // pred_check
              _
            $region71: #{tpu_custom_call.1} parent=64 // pred_check_branch
              %411 = sbr.rel (0) target = $region73
            $region72: #{tpu_custom_call.1} parent=64 // pred_region
              loop: start=0, step=1, limit=1
              $region74: #{tpu_custom_call.1} parent=72 // loop_pre_header
                _
              $region75: #{tpu_custom_call.1} parent=72 // loop_header
                %s414 = sphi 0, %s418
                %p415 = scmp.ge.s32.totalorder %s414, 1
                %s419 = sphi %s405, %s405
                %s420 = sphi %s401, %s401
              $region76: #{tpu_custom_call.1} parent=72 // loop_header_branch
                %417 = sbr.rel (%p415) target = $region80
              $region77: #{tpu_custom_call.1} parent=72 // loop_body
                %v421 = vld [vmem:[%s419] sm:$0x1]
                %422 = vst [vmem:[%s420] sm:$0x1] %v421
                %v423 = vld [vmem:[%s419 + $0x2] sm:$0x1]
                %424 = vst [vmem:[%s420 + $0x1] sm:$0x1] %v423
                %v425 = vld [vmem:[%s419 + $0x4] sm:$0x1]
                %426 = vst [vmem:[%s420 + $0x2] sm:$0x1] %v425
              $region78: #{tpu_custom_call.1} parent=72 // loop_footer
                %s418 = sadd.s32 1, %s414
              $region79: #{tpu_custom_call.1} parent=72 // loop_footer_branch
                %413 = sbr.rel target = $region75
              $region80: #{tpu_custom_call.1} parent=72 // loop_exit
                _
            $region73: #{tpu_custom_call.1} parent=64 // pred_fallthru
              _
          $region65: #{tpu_custom_call.1} parent=60 // pred_fallthru
            _
          %444 = vnop
        $region61: #{tpu_custom_call.1} parent=15 // pred_fallthru
          _
      $region16: #{tpu_custom_call.1} parent=5 // pred_fallthru
        _
      %p445 = scmp.le.s32.totalorder 1, %s16
      %p446 = scmp.lt.s32.totalorder %s16, 5
      %p447 = pnand %p445, %p446
      %p448 = pneg %p447
      // Predicated region
      $region92: #{tpu_custom_call.1} parent=5 // pred_check
        _
      $region93: #{tpu_custom_call.1} parent=5 // pred_check_branch
        %450 = sbr.rel (%p447) target = $region95
      $region94: #{tpu_custom_call.1} parent=5 // pred_region
        %s451 = ssub.s32 %s16, 1
        %s452 = sand.u32 %s43, 1
        %s453 = sand.u32 %s43, 1
        %s454 = smul.addr %s453, 192
        %s455 = scalar_lea.vmem [#allocation2], %s454
        // Predicated region
        $region96: #{tpu_custom_call.1} parent=94 // pred_check
          %p456 = pneg %p56
        $region97: #{tpu_custom_call.1} parent=94 // pred_check_branch
          %458 = sbr.rel (%p456) target = $region99
        $region98: #{tpu_custom_call.1} parent=94 // pred_region
          _
        $region99: #{tpu_custom_call.1} parent=94 // pred_fallthru
          _
        %s459 = sand.u32 %s71, 1
        %s460 = sand.u32 %s71, 1
        %s461 = smul.addr %s460, 3
        %s462 = scalar_lea.vmem [#allocation3], %s461
        // Predicated region
        $region100: #{tpu_custom_call.1} parent=94 // pred_check
          %p463 = pneg %p84
        $region101: #{tpu_custom_call.1} parent=94 // pred_check_branch
          %465 = sbr.rel (%p463) target = $region103
        $region102: #{tpu_custom_call.1} parent=94 // pred_region
          _
        $region103: #{tpu_custom_call.1} parent=94 // pred_fallthru
          _
        %s466 = sand.u32 %s43, 1
        %s467 = sand.u32 %s43, 1
        %s468 = smul.addr %s467, 192
        %s469 = scalar_lea.vmem [#allocation2], %s468
        %p470 = pneg %p56
        %p471 = pneg %p53
        %s472 = sand.u32 %s71, 1
        %s473 = sand.u32 %s71, 1
        %s474 = smul.addr %s473, 3
        %s475 = scalar_lea.vmem [#allocation3], %s474
        %p476 = pneg %p84
        %p477 = pneg %p81
        %p478 = pneg %p110
        %p479 = pneg %p107
        %s480 = sand.u32 %s97, 1
        %s481 = scalar_lea.sflag [#allocation5], %s480
        %s482 = sand.u32 %s97, 1
        %s483 = smul.addr %s482, 3
        %s484 = scalar_lea.vmem [#allocation4], %s483
        %p485 = pneg %p136
        %p486 = pneg %p133
        %s487 = sand.u32 %s123, 1
        %s488 = scalar_lea.sflag [#allocation7], %s487
        %s489 = sand.u32 %s123, 1
        %s490 = smul.addr %s489, 3
        %s491 = scalar_lea.vmem [#allocation6], %s490
        %s492 = smul.u32 3, %s25
        %s493 = smul.u32 16, %s26
        %s494 = smul.u32 3, %s25
        %s495 = smul.u32 3, %s25
        %s496 = smul.u32 3, %s25
        %p498 = scmp.eq.s32.totalorder %s26, 0
        // Predicated region
        $region104: #{tpu_custom_call.1} parent=94 // pred_check
          %p499 = pneg %p498
        $region105: #{tpu_custom_call.1} parent=94 // pred_check_branch
          %501 = sbr.rel (%p499) target = $region107
        $region106: #{tpu_custom_call.1} parent=94 // pred_region
          %vm502 = vcmask 253952
          %503 = vst.msk [vmem:[%s484] sm:$0x1] %vm502, 0.0
          %504 = vst.msk [vmem:[%s484 + $0x1] sm:$0x1] %vm502, 0.0
          %505 = vst.msk [vmem:[%s484 + $0x2] sm:$0x1] %vm502, 0.0
          %506 = vst [vmem:[%s491] sm:$0x1] 0.0
          %507 = vst [vmem:[%s491 + $0x1] sm:$0x1] 0.0
          %508 = vst [vmem:[%s491 + $0x2] sm:$0x1] 0.0
        $region107: #{tpu_custom_call.1} parent=94 // pred_fallthru
          _
        %v509 = vld [vmem:[%s455] sm:$0xf]
        %v510 = vld [vmem:[%s455 + $0x4] sm:$0xf]
        %v511 = vld [vmem:[%s455 + $0x8] sm:$0xf]
        %v512 = vld [vmem:[%s455 + $0xc] sm:$0xf]
        %v513 = vld [vmem:[%s455 + $0x10] sm:$0xf]
        %v514 = vld [vmem:[%s455 + $0x14] sm:$0xf]
        %v515 = vld [vmem:[%s455 + $0x18] sm:$0xf]
        %v516 = vld [vmem:[%s455 + $0x1c] sm:$0xf]
        %v517 = vld [vmem:[%s455 + $0x20] sm:$0xf]
        %v518 = vld [vmem:[%s455 + $0x24] sm:$0xf]
        %v519 = vld [vmem:[%s455 + $0x28] sm:$0xf]
        %v520 = vld [vmem:[%s455 + $0x2c] sm:$0xf]
        %v521 = vld [vmem:[%s455 + $0x30] sm:$0xf]
        %v522 = vld [vmem:[%s455 + $0x34] sm:$0xf]
        %v523 = vld [vmem:[%s455 + $0x38] sm:$0xf]
        %v524 = vld [vmem:[%s455 + $0x3c] sm:$0xf]
        %v525 = vld [vmem:[%s455 + $0x40] sm:$0xf]
        %v526 = vld [vmem:[%s455 + $0x44] sm:$0xf]
        %v527 = vld [vmem:[%s455 + $0x48] sm:$0xf]
        %v528 = vld [vmem:[%s455 + $0x4c] sm:$0xf]
        %v529 = vld [vmem:[%s455 + $0x50] sm:$0xf]
        %v530 = vld [vmem:[%s455 + $0x54] sm:$0xf]
        %v531 = vld [vmem:[%s455 + $0x58] sm:$0xf]
        %v532 = vld [vmem:[%s455 + $0x5c] sm:$0xf]
        %v533 = vld [vmem:[%s455 + $0x60] sm:$0xf]
        %v534 = vld [vmem:[%s455 + $0x64] sm:$0xf]
        %v535 = vld [vmem:[%s455 + $0x68] sm:$0xf]
        %v536 = vld [vmem:[%s455 + $0x6c] sm:$0xf]
        %v537 = vld [vmem:[%s455 + $0x70] sm:$0xf]
        %v538 = vld [vmem:[%s455 + $0x74] sm:$0xf]
        %v539 = vld [vmem:[%s455 + $0x78] sm:$0xf]
        %v540 = vld [vmem:[%s455 + $0x7c] sm:$0xf]
        %v541 = vld [vmem:[%s455 + $0x80] sm:$0xf]
        %v542 = vld [vmem:[%s455 + $0x84] sm:$0xf]
        %v543 = vld [vmem:[%s455 + $0x88] sm:$0xf]
        %v544 = vld [vmem:[%s455 + $0x8c] sm:$0xf]
        %v545 = vld [vmem:[%s455 + $0x90] sm:$0xf]
        %v546 = vld [vmem:[%s455 + $0x94] sm:$0xf]
        %v547 = vld [vmem:[%s455 + $0x98] sm:$0xf]
        %v548 = vld [vmem:[%s455 + $0x9c] sm:$0xf]
        %v549 = vld [vmem:[%s455 + $0xa0] sm:$0xf]
        %v550 = vld [vmem:[%s455 + $0xa4] sm:$0xf]
        %v551 = vld [vmem:[%s455 + $0xa8] sm:$0xf]
        %v552 = vld [vmem:[%s455 + $0xac] sm:$0xf]
        %v553 = vld [vmem:[%s455 + $0xb0] sm:$0xf]
        %v554 = vld [vmem:[%s455 + $0xb4] sm:$0xf]
        %v555 = vld [vmem:[%s455 + $0xb8] sm:$0xf]
        %v556 = vld [vmem:[%s455 + $0xbc] sm:$0xf]
        %v557 = vld [vmem:[%s462] sm:$0x1]
        %v558 = vld [vmem:[%s462 + $0x1] sm:$0x1]
        %v559 = vld [vmem:[%s462 + $0x2] sm:$0x1]
        %v560 = vld [vmem:[%s484] sm:$0x1]
        %v561 = vld [vmem:[%s484 + $0x1] sm:$0x1]
        %v562 = vld [vmem:[%s484 + $0x2] sm:$0x1]
        %v579 = vunpack.c.l.b16 %v509
        %v580 = vunpack.c.l.b16 %v510
        %v581 = vunpack.c.l.b16 %v511
        %v582 = vunpack.c.l.b16 %v512
        %v583 = vunpack.c.l.b16 %v513
        %v584 = vunpack.c.l.b16 %v514
        %v585 = vunpack.c.l.b16 %v515
        %v586 = vunpack.c.l.b16 %v516
        %v587 = vunpack.c.l.b16 %v517
        %v588 = vunpack.c.l.b16 %v518
        %v589 = vunpack.c.l.b16 %v519
        %v590 = vunpack.c.l.b16 %v520
        %v591 = vunpack.c.l.b16 %v521
        %v592 = vunpack.c.l.b16 %v522
        %v593 = vunpack.c.l.b16 %v523
        %v594 = vunpack.c.l.b16 %v524
        %v595 = vpack.c.b16 %v580, %v579
        %v596 = vpack.c.b16 %v582, %v581
        %v597 = vpack.c.b16 %v584, %v583
        %v598 = vpack.c.b16 %v586, %v585
        %v599 = vpack.c.b16 %v588, %v587
        %v600 = vpack.c.b16 %v590, %v589
        %v601 = vpack.c.b16 %v592, %v591
        %v602 = vpack.c.b16 %v594, %v593
        %611 = vmatprep.subr.bf16.mxu0 0
        %612 = vmatpush1.bf16.msra.mxu0 %v595
        %613 = vmatprep.subr.bf16.mxu0 0
        %614 = vmatpush1.bf16.msra.mxu0 %v596
        %615 = vmatprep.subr.bf16.mxu0 0
        %616 = vmatpush1.bf16.msra.mxu0 %v597
        %617 = vmatprep.subr.bf16.mxu0 0
        %618 = vmatpush1.bf16.msra.mxu0 %v598
        %619 = vmatprep.subr.bf16.mxu0 0
        %620 = vmatpush1.bf16.msra.mxu0 %v599
        %621 = vmatprep.subr.bf16.mxu0 0
        %622 = vmatpush1.bf16.msra.mxu0 %v600
        %623 = vmatprep.subr.bf16.mxu0 0
        %624 = vmatpush1.bf16.msra.mxu0 %v601
        %625 = vmatprep.subr.bf16.mxu0 0
        %626 = vmatpush1.bf16.msra.mxu0 %v602
        %627 = vmatprep.subr.bf16.mxu0 0
        %628 = vmatpush1.bf16.msra.mxu0 0
        %629 = vmatprep.subr.bf16.mxu0 0
        %630 = vmatpush1.bf16.msra.mxu0 0
        %631 = vmatprep.subr.bf16.mxu0 0
        %632 = vmatpush1.bf16.msra.mxu0 0
        %633 = vmatprep.subr.bf16.mxu0 0
        %634 = vmatpush1.bf16.msra.mxu0 0
        %635 = vmatprep.subr.bf16.mxu0 0
        %636 = vmatpush1.bf16.msra.mxu0 0
        %637 = vmatprep.subr.bf16.mxu0 0
        %638 = vmatpush1.bf16.msra.mxu0 0
        %639 = vmatprep.subr.bf16.mxu0 0
        %640 = vmatpush1.bf16.msra.mxu0 0
        %641 = vmatprep.subr.bf16.mxu0 0
        %642 = vmatpush1.bf16.msra.mxu0 0
        %643 = vmatprep.mubr.bf16.mxu0 0
        %644 = vmatmul.mubr.bf16.gmra.mrb[0].mxu0 %v557
        %v645 = vpop.f32.mrb[0].mxu0
        %v646 = vadd.f32 0.0, %v645
        %v647 = vpop.f32.mrb[0].mxu0
        %v648 = vpop.f32.mrb[0].mxu0
        %v649 = vpop.f32.mrb[0].mxu0
        %650 = vdwg.mxu0
        %v667 = vunpack.c.l.b16 %v525
        %v668 = vunpack.c.l.b16 %v526
        %v669 = vunpack.c.l.b16 %v527
        %v670 = vunpack.c.l.b16 %v528
        %v671 = vunpack.c.l.b16 %v529
        %v672 = vunpack.c.l.b16 %v530
        %v673 = vunpack.c.l.b16 %v531
        %v674 = vunpack.c.l.b16 %v532
        %v675 = vunpack.c.l.b16 %v533
        %v676 = vunpack.c.l.b16 %v534
        %v677 = vunpack.c.l.b16 %v535
        %v678 = vunpack.c.l.b16 %v536
        %v679 = vunpack.c.l.b16 %v537
        %v680 = vunpack.c.l.b16 %v538
        %v681 = vunpack.c.l.b16 %v539
        %v682 = vunpack.c.l.b16 %v540
        %v683 = vpack.c.b16 %v668, %v667
        %v684 = vpack.c.b16 %v670, %v669
        %v685 = vpack.c.b16 %v672, %v671
        %v686 = vpack.c.b16 %v674, %v673
        %v687 = vpack.c.b16 %v676, %v675
        %v688 = vpack.c.b16 %v678, %v677
        %v689 = vpack.c.b16 %v680, %v679
        %v690 = vpack.c.b16 %v682, %v681
        %699 = vmatprep.subr.bf16.mxu0 0
        %700 = vmatpush1.bf16.msra.mxu0 %v683
        %701 = vmatprep.subr.bf16.mxu0 0
        %702 = vmatpush1.bf16.msra.mxu0 %v684
        %703 = vmatprep.subr.bf16.mxu0 0
        %704 = vmatpush1.bf16.msra.mxu0 %v685
        %705 = vmatprep.subr.bf16.mxu0 0
        %706 = vmatpush1.bf16.msra.mxu0 %v686
        %707 = vmatprep.subr.bf16.mxu0 0
        %708 = vmatpush1.bf16.msra.mxu0 %v687
        %709 = vmatprep.subr.bf16.mxu0 0
        %710 = vmatpush1.bf16.msra.mxu0 %v688
        %711 = vmatprep.subr.bf16.mxu0 0
        %712 = vmatpush1.bf16.msra.mxu0 %v689
        %713 = vmatprep.subr.bf16.mxu0 0
        %714 = vmatpush1.bf16.msra.mxu0 %v690
        %715 = vmatprep.subr.bf16.mxu0 0
        %716 = vmatpush1.bf16.msra.mxu0 0
        %717 = vmatprep.subr.bf16.mxu0 0
        %718 = vmatpush1.bf16.msra.mxu0 0
        %719 = vmatprep.subr.bf16.mxu0 0
        %720 = vmatpush1.bf16.msra.mxu0 0
        %721 = vmatprep.subr.bf16.mxu0 0
        %722 = vmatpush1.bf16.msra.mxu0 0
        %723 = vmatprep.subr.bf16.mxu0 0
        %724 = vmatpush1.bf16.msra.mxu0 0
        %725 = vmatprep.subr.bf16.mxu0 0
        %726 = vmatpush1.bf16.msra.mxu0 0
        %727 = vmatprep.subr.bf16.mxu0 0
        %728 = vmatpush1.bf16.msra.mxu0 0
        %729 = vmatprep.subr.bf16.mxu0 0
        %730 = vmatpush1.bf16.msra.mxu0 0
        %731 = vmatprep.mubr.bf16.mxu0 0
        %732 = vmatmul.mubr.bf16.gmra.mrb[0].mxu0 %v558
        %v733 = vpop.f32.mrb[0].mxu0
        %v734 = vadd.f32 0.0, %v733
        %v735 = vpop.f32.mrb[0].mxu0
        %v736 = vpop.f32.mrb[0].mxu0
        %v737 = vpop.f32.mrb[0].mxu0
        %738 = vdwg.mxu0
        %v755 = vunpack.c.l.b16 %v541
        %v756 = vunpack.c.l.b16 %v542
        %v757 = vunpack.c.l.b16 %v543
        %v758 = vunpack.c.l.b16 %v544
        %v759 = vunpack.c.l.b16 %v545
        %v760 = vunpack.c.l.b16 %v546
        %v761 = vunpack.c.l.b16 %v547
        %v762 = vunpack.c.l.b16 %v548
        %v763 = vunpack.c.l.b16 %v549
        %v764 = vunpack.c.l.b16 %v550
        %v765 = vunpack.c.l.b16 %v551
        %v766 = vunpack.c.l.b16 %v552
        %v767 = vunpack.c.l.b16 %v553
        %v768 = vunpack.c.l.b16 %v554
        %v769 = vunpack.c.l.b16 %v555
        %v770 = vunpack.c.l.b16 %v556
        %v771 = vpack.c.b16 %v756, %v755
        %v772 = vpack.c.b16 %v758, %v757
        %v773 = vpack.c.b16 %v760, %v759
        %v774 = vpack.c.b16 %v762, %v761
        %v775 = vpack.c.b16 %v764, %v763
        %v776 = vpack.c.b16 %v766, %v765
        %v777 = vpack.c.b16 %v768, %v767
        %v778 = vpack.c.b16 %v770, %v769
        %787 = vmatprep.subr.bf16.mxu0 0
        %788 = vmatpush1.bf16.msra.mxu0 %v771
        %789 = vmatprep.subr.bf16.mxu0 0
        %790 = vmatpush1.bf16.msra.mxu0 %v772
        %791 = vmatprep.subr.bf16.mxu0 0
        %792 = vmatpush1.bf16.msra.mxu0 %v773
        %793 = vmatprep.subr.bf16.mxu0 0
        %794 = vmatpush1.bf16.msra.mxu0 %v774
        %795 = vmatprep.subr.bf16.mxu0 0
        %796 = vmatpush1.bf16.msra.mxu0 %v775
        %797 = vmatprep.subr.bf16.mxu0 0
        %798 = vmatpush1.bf16.msra.mxu0 %v776
        %799 = vmatprep.subr.bf16.mxu0 0
        %800 = vmatpush1.bf16.msra.mxu0 %v777
        %801 = vmatprep.subr.bf16.mxu0 0
        %802 = vmatpush1.bf16.msra.mxu0 %v778
        %803 = vmatprep.subr.bf16.mxu0 0
        %804 = vmatpush1.bf16.msra.mxu0 0
        %805 = vmatprep.subr.bf16.mxu0 0
        %806 = vmatpush1.bf16.msra.mxu0 0
        %807 = vmatprep.subr.bf16.mxu0 0
        %808 = vmatpush1.bf16.msra.mxu0 0
        %809 = vmatprep.subr.bf16.mxu0 0
        %810 = vmatpush1.bf16.msra.mxu0 0
        %811 = vmatprep.subr.bf16.mxu0 0
        %812 = vmatpush1.bf16.msra.mxu0 0
        %813 = vmatprep.subr.bf16.mxu0 0
        %814 = vmatpush1.bf16.msra.mxu0 0
        %815 = vmatprep.subr.bf16.mxu0 0
        %816 = vmatpush1.bf16.msra.mxu0 0
        %817 = vmatprep.subr.bf16.mxu0 0
        %818 = vmatpush1.bf16.msra.mxu0 0
        %819 = vmatprep.mubr.bf16.mxu0 0
        %820 = vmatmul.mubr.bf16.gmra.mrb[0].mxu0 %v559
        %v821 = vpop.f32.mrb[0].mxu0
        %v822 = vadd.f32 0.0, %v821
        %v823 = vpop.f32.mrb[0].mxu0
        %v824 = vpop.f32.mrb[0].mxu0
        %v825 = vpop.f32.mrb[0].mxu0
        %826 = vdwg.mxu0
        %v827 = vadd.f32 %v560, %v646
        %v828 = vadd.f32 %v561, %v734
        %v829 = vadd.f32 %v562, %v822
        %vm830 = vcmask 253952
        %831 = vst.msk [vmem:[%s484] sm:$0x1] %vm830, %v827
        %832 = vst.msk [vmem:[%s484 + $0x1] sm:$0x1] %vm830, %v828
        %833 = vst.msk [vmem:[%s484 + $0x2] sm:$0x1] %vm830, %v829
        %v834 = vunpack.c.l.bf16 %v557
        %v835 = vunpack.c.l.bf16 %v558
        %v836 = vunpack.c.l.bf16 %v559
        %vm837 = vcmask 1040384
        %v838 = vsel %vm837, %v834, 0.0
        %839 = vadd.xlane.f32.xlu0 %v838
        %v840 = vpop.xlane.xlu0 %839
        %v841 = vsel %vm837, %v835, 0.0
        %842 = vadd.xlane.f32.xlu0 %v841
        %v843 = vpop.xlane.xlu0 %842
        %v844 = vsel %vm837, %v836, 0.0
        %845 = vadd.xlane.f32.xlu0 %v844
        %v846 = vpop.xlane.xlu0 %845
        %v847 = vld [vmem:[%s491] sm:$0x1]
        %v848 = vld [vmem:[%s491 + $0x1] sm:$0x1]
        %v849 = vld [vmem:[%s491 + $0x2] sm:$0x1]
        %v850 = vadd.f32 %v847, %v840
        %v851 = vadd.f32 %v848, %v843
        %v852 = vadd.f32 %v849, %v846
        %853 = vst [vmem:[%s491] sm:$0x1] %v850
        %854 = vst [vmem:[%s491 + $0x1] sm:$0x1] %v851
        %855 = vst [vmem:[%s491 + $0x2] sm:$0x1] %v852
        %s856 = sand.u32 %s97, 1
        %s857 = scalar_lea.sflag [#allocation5], %s856
        %s858 = sand.u32 %s97, 1
        %s859 = smul.addr %s858, 3
        %s860 = scalar_lea.vmem [#allocation4], %s859
        %s861 = sand.u32 %s123, 1
        %s862 = scalar_lea.sflag [#allocation7], %s861
        %s863 = sand.u32 %s123, 1
        %s864 = smul.addr %s863, 3
        %s865 = scalar_lea.vmem [#allocation6], %s864
        // Predicated region
        $region108: #{tpu_custom_call.1} parent=94 // pred_check
          %p866 = pneg %p107
        $region109: #{tpu_custom_call.1} parent=94 // pred_check_branch
          %868 = sbr.rel (%p866) target = $region111
        $region110: #{tpu_custom_call.1} parent=94 // pred_region
          %s869 = smul.u32 3, %s25
          %s871 = ssub.s32 48, 48
          %872 = vsyncadd %s857, %s871
          %s873 = smul.addr %s869, 16
          %s874 = scalar_lea.hbm %s2, %s873
          %s875 = sshll.u32 %s860, 4
          %s876 = int_to_ptr.vmem [resolvable:$true] %s875
          %881 = dma.vmem_to_hbm [thread:$0]  %s876, 48, %s874, %s857, 16, 16, 1
        $region111: #{tpu_custom_call.1} parent=94 // pred_fallthru
          _
        // Predicated region
        $region112: #{tpu_custom_call.1} parent=94 // pred_check
          %p882 = pneg %p133
        $region113: #{tpu_custom_call.1} parent=94 // pred_check_branch
          %884 = sbr.rel (%p882) target = $region115
        $region114: #{tpu_custom_call.1} parent=94 // pred_region
          %s885 = smul.u32 3, %s25
          %s887 = ssub.s32 48, 48
          %888 = vsyncadd %s862, %s887
          %s889 = smul.addr %s885, 16
          %s890 = scalar_lea.hbm %s3, %s889
          %s891 = sshll.u32 %s865, 4
          %s892 = int_to_ptr.vmem [resolvable:$true] %s891
          %897 = dma.vmem_to_hbm [thread:$0]  %s892, 48, %s890, %s862, 16, 16, 1
        $region115: #{tpu_custom_call.1} parent=94 // pred_fallthru
          _
      $region95: #{tpu_custom_call.1} parent=5 // pred_fallthru
        _
      %p898 = scmp.le.s32.totalorder 2, %s16
      // Predicated region
      $region116: #{tpu_custom_call.1} parent=5 // pred_check
        %p899 = pneg %p898
      $region117: #{tpu_custom_call.1} parent=5 // pred_check_branch
        %901 = sbr.rel (%p899) target = $region119
      $region118: #{tpu_custom_call.1} parent=5 // pred_region
        %s902 = ssub.s32 %s16, 2
        // Predicated region
        $region120: #{tpu_custom_call.1} parent=118 // pred_check
          %p903 = pneg %p113
        $region121: #{tpu_custom_call.1} parent=118 // pred_check_branch
          %905 = sbr.rel (%p903) target = $region123
        $region122: #{tpu_custom_call.1} parent=118 // pred_region
          %s906 = sand.u32 %s98, 1
          %s907 = scalar_lea.sflag [#allocation5], %s906
          %s908 = sand.u32 %s98, 1
          %s909 = smul.addr %s908, 3
          %s910 = scalar_lea.vmem [#allocation4], %s909
          %911 = dma.done %s907, 48
        $region123: #{tpu_custom_call.1} parent=118 // pred_fallthru
          _
        // Predicated region
        $region124: #{tpu_custom_call.1} parent=118 // pred_check
          %p912 = pneg %p139
        $region125: #{tpu_custom_call.1} parent=118 // pred_check_branch
          %914 = sbr.rel (%p912) target = $region127
        $region126: #{tpu_custom_call.1} parent=118 // pred_region
          %s915 = sand.u32 %s124, 1
          %s916 = scalar_lea.sflag [#allocation7], %s915
          %s917 = sand.u32 %s124, 1
          %s918 = smul.addr %s917, 3
          %s919 = scalar_lea.vmem [#allocation6], %s918
          %920 = dma.done %s916, 48
        $region127: #{tpu_custom_call.1} parent=118 // pred_fallthru
          _
      $region119: #{tpu_custom_call.1} parent=5 // pred_fallthru
        _
    $region6: #{tpu_custom_call.1} parent=1 // loop_footer
      %s20 = sadd.s32 1, %s16
    $region7: #{tpu_custom_call.1} parent=1 // loop_footer_branch
      %15 = sbr.rel target = $region3
    $region8: #{tpu_custom_call.1} parent=1 // loop_exit
      _
    %921 = vsyncpa [#allocation5], 1
    %s922 = scalar_lea.sflag [#allocation5], 1
    %923 = vsyncpa %s922, 1
    %924 = vsyncpa [#allocation7], 1
    %s925 = scalar_lea.sflag [#allocation7], 1
    %926 = vsyncpa %s925, 1

</llo_original>
